<compile_context>
chip_gen: v6e
topology: v6e:2x2x1
jax: 0.10.0
libtpu: 0.0.40
codegen_flags: <defaults>
</compile_context>

<pallas_src>
import functools
import math

import jax
import jax.numpy as jnp
from jax import lax
from jax.experimental import pallas as pl
from jax.experimental.pallas import tpu as pltpu


def _round_up(x, m):
    return (x + m - 1) // m * m


def _add_norm_kernel(*refs, eps, has_mask):
    """One (tm, d) row tile: out = LayerNorm(dropout(x) + y) over the lane axis."""
    if has_mask:
        m_ref, x_ref, y_ref, g_ref, b_ref, o_ref = refs
        x = x_ref[...] * m_ref[...]            # pre-scaled keep mask: 0 or 1/(1-p)
    else:
        x_ref, y_ref, g_ref, b_ref, o_ref = refs
        x = x_ref[...]

    # Residual add in the input dtype (bf16 VALU on v6e/v7x); stats in f32.
    z = (x + y_ref[...]).astype(jnp.float32)
    mean = jnp.mean(z, axis=-1, keepdims=True)
    zc = z - mean
    var = jnp.mean(zc * zc, axis=-1, keepdims=True)
    inv = lax.rsqrt(var + eps)                 # EUP, off the VPU critical slot
    out = zc * inv * g_ref[...].astype(jnp.float32) + b_ref[...].astype(jnp.float32)
    o_ref[...] = out.astype(o_ref.dtype)


def add_norm(x, y, gamma, beta, *, eps=1e-5, dropout_rate=0.0, seed=0):
    """out = LayerNorm(dropout(x) + y) over the last axis of x/y."""
    assert x.shape == y.shape, "X and Y must have the same shape"
    d = x.shape[-1]
    assert gamma.shape == (d,) and beta.shape == (d,)

    orig_shape = x.shape
    M = math.prod(orig_shape[:-1]) if len(orig_shape) > 1 else 1
    x2 = x.reshape(M, d)
    y2 = y.reshape(M, d)
    g2 = gamma.reshape(1, d)
    b2 = beta.reshape(1, d)

    use_dropout = float(dropout_rate) > 0.0
    operands = []
    if use_dropout:
        if dropout_rate >= 1.0:
            # nn.Dropout(p=1) zeroes everything (avoids the inf scale).
            mask2 = jnp.zeros((M, d), x.dtype)
        else:
            keep = jax.random.bernoulli(
                jax.random.PRNGKey(seed), 1.0 - float(dropout_rate), (M, d))
            mask2 = keep.astype(x.dtype) * jnp.asarray(
                1.0 / (1.0 - float(dropout_rate)), x.dtype)
        operands.append(mask2)
    operands += [x2, y2, g2, b2]

    # --- Tiling heuristic (dtype-aware, byte-targeted) -----------------------
    itemsize = jnp.dtype(x.dtype).itemsize
    row_bytes = d * itemsize
    n_streams = 4 if use_dropout else 3          # x, y, out (+ mask)
    # ~2 MiB per stream block, at least 256 rows when possible.
    tm_target = max(256, _round_up(max(1, (2 * 1024 * 1024) // row_bytes), 8))
    # Double-buffered working set capped at ~36 MiB (fits v7x's 64 MiB VMEM).
    max_tm = max(8, (36 * 1024 * 1024 // (n_streams * 2 * row_bytes)) // 8 * 8)
    # Keep >= 4 grid steps when M allows, so v7x's two TCs both get work.
    min_steps = 4 if M >= 64 else 1
    tm_par_cap = _round_up(max(8, -(-M // min_steps)), 8)
    tm_eff = max(8, min(tm_target, max_tm, tm_par_cap))
    grid = (pl.cdiv(M, tm_eff),)

    row_spec = pl.BlockSpec((tm_eff, d), lambda i: (i, 0))
    vec_spec = pl.BlockSpec((1, d), lambda i: (0, 0))
    in_specs = ([row_spec] if use_dropout else []) + [row_spec, row_spec,
                                                      vec_spec, vec_spec]

    cost = pl.CostEstimate(
        flops=(10 if use_dropout else 8) * M * d,
        transcendentals=M,
        bytes_accessed=n_streams * M * d * itemsize + 2 * d * itemsize,
    )

    kernel = functools.partial(_add_norm_kernel, eps=float(eps),
                               has_mask=use_dropout)

    out2 = pl.pallas_call(
        kernel,
        out_shape=jax.ShapeDtypeStruct((M, d), x.dtype),
        grid_spec=pltpu.PrefetchScalarGridSpec(
            num_scalar_prefetch=0,
            grid=grid,
            in_specs=in_specs,
            out_specs=row_spec,
        ),
        compiler_params=pltpu.CompilerParams(
            dimension_semantics=("parallel",),       # rows shard across TCs (v7x)
            vmem_limit_bytes=48 * 1024 * 1024,       # > v5e's 16 MiB scoped default
        ),
        cost_estimate=cost,
    )(*operands)

    return out2.reshape(orig_shape)


def _ref_add_norm(x, y, gamma, beta, eps=1e-5):
    """Plain-JAX reference (eval mode: dropout is identity)."""
    z = x + y
    mu = jnp.mean(z, axis=-1, keepdims=True)
    var = jnp.mean((z - mu) ** 2, axis=-1, keepdims=True)
    return (z - mu) / jnp.sqrt(var + eps) * gamma + beta


if __name__ == "__main__":
    key = jax.random.PRNGKey(0)
    kx, ky, kg, kb, kx2, ky2, kx3, ky3 = jax.random.split(key, 8)

    # Test 1: small AddNorm shapes (batch=2, seq=8, hidden=32); d not a
    # multiple of 128 -> exercises the non-lane-dense (full-d block) path.
    batch, seq, d = 2, 8, 32
    x = jax.random.normal(kx, (batch, seq, d), dtype=jnp.float32)
    y = jax.random.normal(ky, (batch, seq, d), dtype=jnp.float32)
    gamma = 1.0 + 0.1 * jax.random.normal(kg, (d,), dtype=jnp.float32)
    beta = 0.1 * jax.random.normal(kb, (d,), dtype=jnp.float32)

    out = jax.block_until_ready(add_norm(x, y, gamma, beta, dropout_rate=0.0))
    assert out.shape == x.shape
    assert jnp.allclose(out, _ref_add_norm(x, y, gamma, beta), atol=1e-4, rtol=1e-4)

    # Test 2: lane-aligned shapes with a multi-step parallel grid.
    b2, s2, d2 = 2, 256, 128
    xa = jax.random.normal(kx2, (b2, s2, d2), dtype=jnp.float32)
    ya = jax.random.normal(ky2, (b2, s2, d2), dtype=jnp.float32)
    ga = jnp.ones((d2,), jnp.float32)
    ba = jnp.zeros((d2,), jnp.float32)
    outa = jax.block_until_ready(add_norm(xa, ya, ga, ba))
    assert jnp.allclose(outa, _ref_add_norm(xa, ya, ga, ba), atol=1e-4, rtol=1e-4)

    # Test 3: M not divisible by the row tile -> partial last block (no pads).
    b3, s3, d3 = 3, 70, 128
    xb = jax.random.normal(kx3, (b3, s3, d3), dtype=jnp.float32)
    yb = jax.random.normal(ky3, (b3, s3, d3), dtype=jnp.float32)
    outb = jax.block_until_ready(add_norm(xb, yb, ga, ba))
    assert jnp.allclose(outb, _ref_add_norm(xb, yb, ga, ba), atol=1e-4, rtol=1e-4)

    # Test 4: dropout (training-mode) path.  The keep-mask is derived
    # deterministically from the seed, so we can check exactly against the
    # reference applied to the same masked X.
    rate, dseed = 0.5, 123
    outd = jax.block_until_ready(add_norm(x, y, gamma, beta,
                                          dropout_rate=rate, seed=dseed))
    keep = jax.random.bernoulli(jax.random.PRNGKey(dseed), 1.0 - rate,
                                (batch * seq, d)).reshape(batch, seq, d)
    x_masked = x * keep.astype(x.dtype) * (1.0 / (1.0 - rate))
    refd = _ref_add_norm(x_masked, y, gamma, beta)
    assert outd.shape == x.shape
    assert bool(jnp.all(jnp.isfinite(outd)))
    assert jnp.allclose(outd, refd, atol=1e-4, rtol=1e-4)
    # Determinism for a fixed seed.
    outd2 = jax.block_until_ready(add_norm(x, y, gamma, beta,
                                           dropout_rate=rate, seed=dseed))
    assert jnp.allclose(outd, outd2)

    # Test 5: dropout_rate = 1.0 -> out == LayerNorm(Y) (no inf/nan).
    out1 = jax.block_until_ready(add_norm(x, y, gamma, beta, dropout_rate=1.0))
    assert jnp.allclose(out1, _ref_add_norm(jnp.zeros_like(x), y, gamma, beta),
                        atol=1e-4, rtol=1e-4)

    print("KERNEL_OK")
</pallas_src>

<mosaic_0001>
module attributes {stable_mosaic.version = 11 : i64} {
  func.func @_add_norm_kernel(%arg0: i32, %arg1: memref<16x32xf32, #tpu.memory_space<vmem>>, %arg2: memref<16x32xf32, #tpu.memory_space<vmem>>, %arg3: memref<1x32xf32, #tpu.memory_space<vmem>>, %arg4: memref<1x32xf32, #tpu.memory_space<vmem>>, %arg5: memref<16x32xf32, #tpu.memory_space<vmem>>) attributes {dimension_semantics = [#tpu.dimension_semantics<parallel>], iteration_bounds = array<i64: 1>, scalar_prefetch = 0 : i64, scratch_operands = 0 : i64, tpu.core_type = #tpu.core_type<tc>, window_params = [{transform_indices = @transform_0, window_bounds = array<i64: 16, 32>}, {transform_indices = @transform_1, window_bounds = array<i64: 16, 32>}, {pipeline_mode = #tpu.pipeline_mode<synchronous>, transform_indices = @transform_2, window_bounds = array<i64: 1, 32>}, {pipeline_mode = #tpu.pipeline_mode<synchronous>, transform_indices = @transform_3, window_bounds = array<i64: 1, 32>}, {transform_indices = @transform_4, window_bounds = array<i64: 16, 32>}]} {
    %c0 = arith.constant 0 : index
    %c0_0 = arith.constant 0 : index
    %0 = vector.load %arg1[%c0, %c0_0] : memref<16x32xf32, #tpu.memory_space<vmem>>, vector<16x32xf32>
    %c0_1 = arith.constant 0 : index
    %c0_2 = arith.constant 0 : index
    %1 = vector.load %arg2[%c0_1, %c0_2] : memref<16x32xf32, #tpu.memory_space<vmem>>, vector<16x32xf32>
    %2 = arith.addf %0, %1 : vector<16x32xf32>
    %cst = arith.constant dense<0.000000e+00> : vector<16xf32>
    %3 = vector.multi_reduction <add>, %2, %cst [1] : vector<16x32xf32> to vector<16xf32>
    %4 = vector.shape_cast %3 : vector<16xf32> to vector<16x1xf32>
    %cst_3 = arith.constant 3.200000e+01 : f32
    %5 = vector.broadcast %cst_3 : f32 to vector<16x1xf32>
    %6 = arith.divf %4, %5 : vector<16x1xf32>
    %7 = vector.broadcast %6 : vector<16x1xf32> to vector<16x32xf32>
    %8 = arith.subf %2, %7 : vector<16x32xf32>
    %9 = arith.mulf %8, %8 : vector<16x32xf32>
    %cst_4 = arith.constant dense<0.000000e+00> : vector<16xf32>
    %10 = vector.multi_reduction <add>, %9, %cst_4 [1] : vector<16x32xf32> to vector<16xf32>
    %11 = vector.shape_cast %10 : vector<16xf32> to vector<16x1xf32>
    %cst_5 = arith.constant 3.200000e+01 : f32
    %12 = vector.broadcast %cst_5 : f32 to vector<16x1xf32>
    %13 = arith.divf %11, %12 : vector<16x1xf32>
    %cst_6 = arith.constant 9.99999974E-6 : f32
    %14 = vector.broadcast %cst_6 : f32 to vector<16x1xf32>
    %15 = arith.addf %13, %14 : vector<16x1xf32>
    %16 = math.rsqrt %15 : vector<16x1xf32>
    %17 = vector.broadcast %16 : vector<16x1xf32> to vector<16x32xf32>
    %18 = arith.mulf %8, %17 : vector<16x32xf32>
    %c0_7 = arith.constant 0 : index
    %c0_8 = arith.constant 0 : index
    %19 = vector.load %arg3[%c0_7, %c0_8] : memref<1x32xf32, #tpu.memory_space<vmem>>, vector<1x32xf32>
    %20 = vector.broadcast %19 : vector<1x32xf32> to vector<16x32xf32>
    %21 = arith.mulf %18, %20 : vector<16x32xf32>
    %c0_9 = arith.constant 0 : index
    %c0_10 = arith.constant 0 : index
    %22 = vector.load %arg4[%c0_9, %c0_10] : memref<1x32xf32, #tpu.memory_space<vmem>>, vector<1x32xf32>
    %23 = vector.broadcast %22 : vector<1x32xf32> to vector<16x32xf32>
    %24 = arith.addf %21, %23 : vector<16x32xf32>
    %c0_11 = arith.constant 0 : index
    %c0_12 = arith.constant 0 : index
    %25 = vector.load %arg5[%c0_11, %c0_12] : memref<16x32xf32, #tpu.memory_space<vmem>>, vector<16x32xf32>
    tpu.vector_store %arg5[%c0_11, %c0_12], %24 {strides = array<i32>} : memref<16x32xf32, #tpu.memory_space<vmem>>, vector<16x32xf32>,
    return
  }
  func.func @transform_0(%arg0: i32) -> (i32, i32) {
    %c0_i32 = arith.constant 0 : i32
    %c0_i32_0 = arith.constant 0 : i32
    return %arg0, %c0_i32 : i32, i32
  }
  func.func @transform_1(%arg0: i32) -> (i32, i32) {
    %c0_i32 = arith.constant 0 : i32
    %c0_i32_0 = arith.constant 0 : i32
    return %arg0, %c0_i32 : i32, i32
  }
  func.func @transform_2(%arg0: i32) -> (i32, i32) {
    %c0_i32 = arith.constant 0 : i32
    %c0_i32_0 = arith.constant 0 : i32
    %c0_i32_1 = arith.constant 0 : i32
    return %c0_i32, %c0_i32_0 : i32, i32
  }
  func.func @transform_3(%arg0: i32) -> (i32, i32) {
    %c0_i32 = arith.constant 0 : i32
    %c0_i32_0 = arith.constant 0 : i32
    %c0_i32_1 = arith.constant 0 : i32
    return %c0_i32, %c0_i32_0 : i32, i32
  }
  func.func @transform_4(%arg0: i32) -> (i32, i32) {
    %c0_i32 = arith.constant 0 : i32
    %c0_i32_0 = arith.constant 0 : i32
    return %arg0, %c0_i32 : i32, i32
  }
}

</mosaic_0001>

<llo_original>
// kernel: tpu_custom_call.1
$region0: #{tpu_custom_call.1}
  #allocation0 [shape = 'u32[]', space=smem, size = 0x4, offset = 0x4, fixed_abs, tag = 'smem constant byte address 0x4 - core index']
  #allocation1 [shape = 'u32[144,128]{1,0:T(1,128)}', space=vmem, size = 0x12000, scoped, tag = 'internal scratch']
  %s0 = inlined_call_operand.hbm [shape: f32[16,32], index: 0, kind: input, shape index: {}]
  %s1 = inlined_call_operand.hbm [shape: f32[16,32], index: 1, kind: input, shape index: {}]
  %s2 = inlined_call_operand.vmem [shape: f32[1,32], index: 2, kind: input, shape index: {}]
  %s3 = inlined_call_operand.vmem [shape: f32[1,32], index: 3, kind: input, shape index: {}]
  %s4 = inlined_call_operand.hbm [shape: f32[16,32], index: 4, kind: output, shape index: {}]
  %s5 = sld [smem:[#allocation0]]
  $region34: #{tpu_custom_call.1} parent=0
    _
  %s7 = ssub.s32 1, %s5
  %s8 = scalar_select 0, %s7, %s5
  $region1: #{tpu_custom_call.1} parent=0
    #allocation2 [shape = 'u8[8192]{0}', space=vmem, size = 0x2000, scoped, tag = 'input window, operand 0, single buffered']
    #allocation3 [shape = 's32[1]{0}', space=sflag, size = 0x4, scoped, tag = 'scoped memory for tpu_custom_call.1']
    #allocation4 [shape = 's32[1]{0}', space=sflag, size = 0x4, scoped, tag = 'scoped memory for tpu_custom_call.1']
    #allocation5 [shape = 'u8[8192]{0}', space=vmem, size = 0x2000, scoped, tag = 'input window, operand 1, single buffered']
    #allocation6 [shape = 's32[1]{0}', space=sflag, size = 0x4, scoped, tag = 'scoped memory for tpu_custom_call.1']
    #allocation7 [shape = 'u8[8192]{0}', space=vmem, size = 0x2000, scoped, tag = 'output window, operand 0, single buffered']
    %9 = vsyncpa [#allocation3], 0
    %10 = vsyncpa [#allocation6], 0
    %11 = vsyncpa [#allocation4], 0
    // Predicated region
    $region2: #{tpu_custom_call.1} parent=1 // pred_check
      _
    $region3: #{tpu_custom_call.1} parent=1 // pred_check_branch
      %13 = sbr.rel (0) target = $region5
    $region4: #{tpu_custom_call.1} parent=1 // pred_region
      %s15 = ssub.s32 256, 256
      %16 = vsyncadd [#allocation3], %s15
      %s17 = sshll.u32 [#allocation2], 4
      %s18 = int_to_ptr.vmem [resolvable:$true] %s17
      %23 = dma.hbm_to_vmem [thread:$0]  %s0, 256, %s18, [#allocation3], 128, 128, 8
    $region5: #{tpu_custom_call.1} parent=1 // pred_fallthru
      _
    // Predicated region
    $region6: #{tpu_custom_call.1} parent=1 // pred_check
      _
    $region7: #{tpu_custom_call.1} parent=1 // pred_check_branch
      %25 = sbr.rel (0) target = $region9
    $region8: #{tpu_custom_call.1} parent=1 // pred_region
      %s27 = ssub.s32 256, 256
      %28 = vsyncadd [#allocation6], %s27
      %s29 = sshll.u32 [#allocation5], 4
      %s30 = int_to_ptr.vmem [resolvable:$true] %s29
      %35 = dma.hbm_to_vmem [thread:$0]  %s1, 256, %s30, [#allocation6], 128, 128, 8
    $region9: #{tpu_custom_call.1} parent=1 // pred_fallthru
      _
    // Predicated region
    $region10: #{tpu_custom_call.1} parent=1 // pred_check
      _
    $region11: #{tpu_custom_call.1} parent=1 // pred_check_branch
      %37 = sbr.rel (0) target = $region13
    $region12: #{tpu_custom_call.1} parent=1 // pred_region
      _
    $region13: #{tpu_custom_call.1} parent=1 // pred_fallthru
      _
    // Predicated region
    $region14: #{tpu_custom_call.1} parent=1 // pred_check
      _
    $region15: #{tpu_custom_call.1} parent=1 // pred_check_branch
      %39 = sbr.rel (0) target = $region17
    $region16: #{tpu_custom_call.1} parent=1 // pred_region
      _
    $region17: #{tpu_custom_call.1} parent=1 // pred_fallthru
      _
    // Predicated region
    $region18: #{tpu_custom_call.1} parent=1 // pred_check
      _
    $region19: #{tpu_custom_call.1} parent=1 // pred_check_branch
      %41 = sbr.rel (0) target = $region21
    $region20: #{tpu_custom_call.1} parent=1 // pred_region
      %42 = dma.done [#allocation3], 256
    $region21: #{tpu_custom_call.1} parent=1 // pred_fallthru
      _
    // Predicated region
    $region22: #{tpu_custom_call.1} parent=1 // pred_check
      _
    $region23: #{tpu_custom_call.1} parent=1 // pred_check_branch
      %44 = sbr.rel (0) target = $region25
    $region24: #{tpu_custom_call.1} parent=1 // pred_region
      %45 = dma.done [#allocation6], 256
    $region25: #{tpu_custom_call.1} parent=1 // pred_fallthru
      _
    %v46 = vld [vmem:[#allocation2] sm:$0xff]
    %v47 = vld [vmem:[#allocation2 + $0x8] sm:$0xff]
    %v48 = vld [vmem:[#allocation5] sm:$0xff]
    %v49 = vld [vmem:[#allocation5 + $0x8] sm:$0xff]
    %v50 = vadd.f32 %v46, %v48
    %v51 = vadd.f32 %v47, %v49
    %vm52 = vcmask 261120
    %v53 = vsel %vm52, %v50, 0.0
    %54 = vadd.xlane.f32.xlu0 %v53
    %v55 = vpop.xlane.xlu0 %54
    %v56 = vsel %vm52, %v51, 0.0
    %57 = vadd.xlane.f32.xlu0 %v56
    %v58 = vpop.xlane.xlu0 %57
    %v59 = vrcp.pop 32.0
    %v60 = vmul.f32 %v55, %v59
    %v61 = vmul.f32 %v58, %v59
    %v62 = vsub.f32 %v50, %v60
    %v63 = vsub.f32 %v51, %v61
    %v64 = vmul.f32 %v62, %v62
    %v65 = vmul.f32 %v63, %v63
    %v66 = vsel %vm52, %v64, 0.0
    %67 = vadd.xlane.f32.xlu0 %v66
    %v68 = vpop.xlane.xlu0 %67
    %v69 = vsel %vm52, %v65, 0.0
    %70 = vadd.xlane.f32.xlu0 %v69
    %v71 = vpop.xlane.xlu0 %70
    %v72 = vmul.f32 %v68, %v59
    %v73 = vmul.f32 %v71, %v59
    %v74 = vadd.f32 %v72, 1e-05
    %v75 = vadd.f32 %v73, 1e-05
    %v76 = vrsqrt.pop %v74
    %v77 = vrsqrt.pop %v75
    %v78 = vmul.f32 %v62, %v76
    %v79 = vmul.f32 %v63, %v77
    %v80 = vld [vmem:[%s2] sm:$0x1]
    %v82 = vlaneseq
    %v83 = vshrl.u32 %v82, 7
    %v84 = vsub.s32 0, %v83
    %v85 = vrot.slane %v80, %v84
    %v87 = vmul.f32 %v78, %v85
    %v88 = vmul.f32 %v79, %v85
    %v89 = vld [vmem:[%s3] sm:$0x1]
    %v91 = vlaneseq
    %v92 = vshrl.u32 %v91, 7
    %v93 = vsub.s32 0, %v92
    %v94 = vrot.slane %v89, %v93
    %v96 = vadd.f32 %v87, %v94
    %v97 = vadd.f32 %v88, %v94
    %98 = vst.msk [vmem:[#allocation7] sm:$0xff] %vm52, %v96
    %99 = vst.msk [vmem:[#allocation7 + $0x8] sm:$0xff] %vm52, %v97
    // Predicated region
    $region26: #{tpu_custom_call.1} parent=1 // pred_check
      _
    $region27: #{tpu_custom_call.1} parent=1 // pred_check_branch
      %101 = sbr.rel (0) target = $region29
    $region28: #{tpu_custom_call.1} parent=1 // pred_region
      %s103 = ssub.s32 256, 256
      %104 = vsyncadd [#allocation4], %s103
      %s105 = sshll.u32 [#allocation7], 4
      %s106 = int_to_ptr.vmem [resolvable:$true] %s105
      %111 = dma.vmem_to_hbm [thread:$0]  %s106, 256, %s4, [#allocation4], 128, 128, 8
    $region29: #{tpu_custom_call.1} parent=1 // pred_fallthru
      _
    // Predicated region
    $region30: #{tpu_custom_call.1} parent=1 // pred_check
      _
    $region31: #{tpu_custom_call.1} parent=1 // pred_check_branch
      %113 = sbr.rel (0) target = $region33
    $region32: #{tpu_custom_call.1} parent=1 // pred_region
      %114 = dma.done [#allocation4], 256
    $region33: #{tpu_custom_call.1} parent=1 // pred_fallthru
      _
    %115 = vsyncpa [#allocation3], 1
    %116 = vsyncpa [#allocation6], 1
    %117 = vsyncpa [#allocation4], 1

</llo_original>
